<compile_context>
chip_gen: v5e
topology: v5e:2x2
jax: 0.10.0
libtpu: 0.0.40
codegen_flags: <defaults>
</compile_context>

<pallas_src>
from functools import partial

import jax
import jax.numpy as jnp
from jax.experimental import pallas as pl
from jax.experimental.pallas import tpu as pltpu


def _round_up(x, m):
    return ((x + m - 1) // m) * m


def _make_kernel(chunk, n_chunks, unroll):
    """Build the kernel for a fixed (chunk, n_chunks) inner-loop configuration."""

    def kernel(xT_ref, w1_ref, w2_ref, w3_ref, w4_ref, oT_ref):
        # ---- hoisted once per grid step (weights are VMEM-resident) ----------
        w1 = w1_ref[...]                       # (10, 2)
        w2 = w2_ref[...]                       # (50, 10)
        w3 = w3_ref[...]                       # (4, 50)
        w4 = w4_ref[...]                       # (4, 4)
        # Weight-column lane-splats, hoisted out of the sub-chunk loop
        # (JAX does not CSE broadcast_in_dim; re-broadcasting per chunk wastes VPU/XLU).
        w1c0 = jnp.broadcast_to(w1[:, 0:1], (10, chunk))
        w1c1 = jnp.broadcast_to(w1[:, 1:2], (10, chunk))
        w4c0 = jnp.broadcast_to(w4[:, 0:1], (4, chunk))
        w4c1 = jnp.broadcast_to(w4[:, 1:2], (4, chunk))
        w4c2 = jnp.broadcast_to(w4[:, 2:3], (4, chunk))
        w4c3 = jnp.broadcast_to(w4[:, 3:4], (4, chunk))

        # ---- inner loop over lane sub-chunks: keeps live intermediates small --
        def body(c, carry):
            j = pl.multiple_of(c * chunk, chunk)          # aligned lane offset
            xT = xT_ref[:, pl.ds(j, chunk)]               # (2, chunk) f32

            # fc1 (K=2): VPU broadcast-FMA + relu          -> (10, chunk)
            h1 = w1c0 * xT[0:1, :] + w1c1 * xT[1:2, :]
            h1 = jnp.maximum(h1, 0.0)

            # fc2 (K=10): MXU + relu                       -> (50, chunk)
            h2 = jnp.dot(w2, h1, preferred_element_type=jnp.float32)
            h2 = jnp.maximum(h2, 0.0)

            # fc3 (K=50): MXU + relu                       -> (4, chunk)
            h3 = jnp.dot(w3, h2, preferred_element_type=jnp.float32)
            h3 = jnp.maximum(h3, 0.0)

            # fc4 (K=4): VPU broadcast-FMA (no relu)       -> (4, chunk)
            logits = (w4c0 * h3[0:1, :] + w4c1 * h3[1:2, :]
                      + w4c2 * h3[2:3, :] + w4c3 * h3[3:4, :])

            # Numerically stable softmax over the 4-sublane feature axis.
            m = jnp.max(logits, axis=0, keepdims=True)
            e = jnp.exp(logits - m)
            denom = jnp.sum(e, axis=0, keepdims=True)
            # approx reciprocal -> rows sum to 1 within ~1e-3 (fine for this module);
            # use approx=False if exact normalization is required downstream.
            out = e * pl.reciprocal(denom, approx=True)
            oT_ref[:, pl.ds(j, chunk)] = out.astype(oT_ref.dtype)
            return carry

        jax.lax.fori_loop(0, n_chunks, body, 0, unroll=unroll)

    return kernel


def quadra_gpu_net_featmajor(xT, w1, w2, w3, w4, *, tile_n=4096, chunk=256,
                             core_parallel=False):
    """Primary (layout-friendly) entry point.

    xT: (2, N) float32, batch on the lane axis.  Weights in PyTorch layout
    (out_features, in_features).  Returns (4, N) float32 softmax probabilities.
    """
    n = xT.shape[1]
    # Enforce lane-dense tiling: chunk and tile_n are multiples of 128, and the
    # tile is a multiple of the inner sub-chunk.
    chunk = max(128, _round_up(chunk, 128))
    tile_n = max(chunk, _round_up(tile_n, chunk))
    tile_n = min(tile_n, _round_up(max(n, 1), chunk))   # don't over-tile tiny batches
    n_pad = _round_up(max(n, 1), tile_n)                # pads at most tile_n-1 columns

    if n_pad != n:
        # Zero-padded columns produce uniform 0.25 softmax rows; they are sliced
        # off below and must never be consumed by a fused downstream op.
        xT = jnp.pad(xT, ((0, 0), (0, n_pad - n)))

    trips = tile_n // chunk
    unroll = True if trips <= 8 else 4                  # keep code size sane for big tiles
    kernel = _make_kernel(chunk, trips, unroll)

    # Plain "parallel" does not engage v7x's second TensorCore; CORE_PARALLEL does.
    sem = pltpu.CORE_PARALLEL if core_parallel else "parallel"
    resident = lambda shape: pl.BlockSpec(shape, lambda i: (0, 0))

    oT = pl.pallas_call(
        kernel,
        out_shape=jax.ShapeDtypeStruct((4, n_pad), jnp.float32),
        grid=(n_pad // tile_n,),
        in_specs=[
            pl.BlockSpec((2, tile_n), lambda i: (0, i)),   # activations stream over the batch grid
            resident(w1.shape),                            # (10, 2)  VMEM-resident
            resident(w2.shape),                            # (50, 10)
            resident(w3.shape),                            # (4, 50)
            resident(w4.shape),                            # (4, 4)
        ],
        out_specs=pl.BlockSpec((4, tile_n), lambda i: (0, i)),
        compiler_params=pltpu.CompilerParams(dimension_semantics=(sem,)),
    )(xT, w1, w2, w3, w4)

    return oT[:, :n]


@partial(jax.jit, static_argnames=("tile_n", "chunk", "core_parallel"))
def quadra_gpu_net(x, w1, w2, w3, w4, *, tile_n=4096, chunk=256, core_parallel=False):
    """PyTorch-parity interface: x (N, 2) -> (N, 4).

    Jitted so the (N,2)<->(2,N) layout passes fuse with surrounding XLA ops instead
    of materializing standalone HBM copies.
    """
    oT = quadra_gpu_net_featmajor(x.T, w1, w2, w3, w4,
                                  tile_n=tile_n, chunk=chunk,
                                  core_parallel=core_parallel)
    return oT.T


def _init_linear_weight(key, out_features, in_features):
    # Deterministic init mimicking torch.nn.Linear default: U(-1/sqrt(fan_in), +1/sqrt(fan_in))
    bound = 1.0 / (in_features ** 0.5)
    return jax.random.uniform(
        key, (out_features, in_features), dtype=jnp.float32, minval=-bound, maxval=bound
    )


def _reference(x, w1, w2, w3, w4):
    h = jax.nn.relu(x @ w1.T)
    h = jax.nn.relu(h @ w2.T)
    h = jax.nn.relu(h @ w3.T)
    logits = h @ w4.T
    return jax.nn.softmax(logits, axis=1)


if __name__ == "__main__":
    key = jax.random.PRNGKey(0)
    kx, k1, k2, k3, k4, kx2 = jax.random.split(key, 6)

    w1 = _init_linear_weight(k1, 10, 2)    # fc1: Linear(2, 10, bias=False)
    w2 = _init_linear_weight(k2, 50, 10)   # fc2: Linear(10, 50, bias=False)
    w3 = _init_linear_weight(k3, 4, 50)    # fc3: Linear(50, 4, bias=False)
    w4 = _init_linear_weight(k4, 4, 4)     # fc4: Linear(4, 4, bias=False)

    # TODO(synk): no_grad_param (long tensor [2, 2]) is unused in forward; kept only for parity.
    no_grad_param = jnp.array([2, 2], dtype=jnp.int32)

    # 1) Small-batch check through the PyTorch-parity (N,2)->(N,4) wrapper.
    batch = 8
    x = jax.random.normal(kx, (batch, 2), dtype=jnp.float32)
    out = jax.block_until_ready(quadra_gpu_net(x, w1, w2, w3, w4))
    ref = _reference(x, w1, w2, w3, w4)
    assert out.shape == (batch, 4)
    assert jnp.allclose(out, ref, atol=2e-3, rtol=2e-3), "mismatch vs reference (small batch)"
    assert jnp.allclose(jnp.sum(out, axis=1), 1.0, atol=2e-3), "softmax rows must sum to 1"

    # 2) Ragged batch through the feature-major (2,N)->(4,N) path, exercising the
    #    multi-tile batch grid and the in-kernel sub-chunk loop.
    batch2 = 300
    x2 = jax.random.normal(kx2, (batch2, 2), dtype=jnp.float32)
    out2T = jax.block_until_ready(
        quadra_gpu_net_featmajor(x2.T, w1, w2, w3, w4, tile_n=256, chunk=128))
    ref2 = _reference(x2, w1, w2, w3, w4)
    assert out2T.shape == (4, batch2)
    assert jnp.allclose(out2T.T, ref2, atol=2e-3, rtol=2e-3), "mismatch vs reference (tiled batch)"

    print("KERNEL_OK")
</pallas_src>

<mosaic_0001>
module attributes {stable_mosaic.version = 11 : i64} {
  func.func @kernel(%arg0: i32, %arg1: memref<2x256xf32, #tpu.memory_space<vmem>>, %arg2: memref<10x2xf32, #tpu.memory_space<vmem>>, %arg3: memref<50x10xf32, #tpu.memory_space<vmem>>, %arg4: memref<4x50xf32, #tpu.memory_space<vmem>>, %arg5: memref<4x4xf32, #tpu.memory_space<vmem>>, %arg6: memref<4x256xf32, #tpu.memory_space<vmem>>) attributes {dimension_semantics = [#tpu.dimension_semantics<parallel>], iteration_bounds = array<i64: 1>, scalar_prefetch = 0 : i64, scratch_operands = 0 : i64, tpu.core_type = #tpu.core_type<tc>, window_params = [{transform_indices = @transform_0, window_bounds = array<i64: 2, 256>}, {pipeline_mode = #tpu.pipeline_mode<synchronous>, transform_indices = @transform_1, window_bounds = array<i64: 10, 2>}, {pipeline_mode = #tpu.pipeline_mode<synchronous>, transform_indices = @transform_2, window_bounds = array<i64: 50, 10>}, {pipeline_mode = #tpu.pipeline_mode<synchronous>, transform_indices = @transform_3, window_bounds = array<i64: 4, 50>}, {pipeline_mode = #tpu.pipeline_mode<synchronous>, transform_indices = @transform_4, window_bounds = array<i64: 4, 4>}, {transform_indices = @transform_5, window_bounds = array<i64: 4, 256>}]} {
    %c0 = arith.constant 0 : index
    %c0_0 = arith.constant 0 : index
    %0 = vector.load %arg2[%c0, %c0_0] : memref<10x2xf32, #tpu.memory_space<vmem>>, vector<10x2xf32>
    %c0_1 = arith.constant 0 : index
    %c0_2 = arith.constant 0 : index
    %1 = vector.load %arg3[%c0_1, %c0_2] : memref<50x10xf32, #tpu.memory_space<vmem>>, vector<50x10xf32>
    %c0_3 = arith.constant 0 : index
    %c0_4 = arith.constant 0 : index
    %2 = vector.load %arg4[%c0_3, %c0_4] : memref<4x50xf32, #tpu.memory_space<vmem>>, vector<4x50xf32>
    %c0_5 = arith.constant 0 : index
    %c0_6 = arith.constant 0 : index
    %3 = vector.load %arg5[%c0_5, %c0_6] : memref<4x4xf32, #tpu.memory_space<vmem>>, vector<4x4xf32>
    %4 = vector.extract_strided_slice %0 {offsets = [0, 0], sizes = [10, 1], strides = [1, 1]} : vector<10x2xf32> to vector<10x1xf32>
    %5 = vector.shape_cast %4 : vector<10x1xf32> to vector<10x1xf32>
    %6 = vector.broadcast %5 : vector<10x1xf32> to vector<10x256xf32>
    %7 = vector.extract_strided_slice %0 {offsets = [0, 1], sizes = [10, 1], strides = [1, 1]} : vector<10x2xf32> to vector<10x1xf32>
    %8 = vector.shape_cast %7 : vector<10x1xf32> to vector<10x1xf32>
    %9 = vector.broadcast %8 : vector<10x1xf32> to vector<10x256xf32>
    %10 = vector.extract_strided_slice %3 {offsets = [0, 0], sizes = [4, 1], strides = [1, 1]} : vector<4x4xf32> to vector<4x1xf32>
    %11 = vector.shape_cast %10 : vector<4x1xf32> to vector<4x1xf32>
    %12 = vector.broadcast %11 : vector<4x1xf32> to vector<4x256xf32>
    %13 = vector.extract_strided_slice %3 {offsets = [0, 1], sizes = [4, 1], strides = [1, 1]} : vector<4x4xf32> to vector<4x1xf32>
    %14 = vector.shape_cast %13 : vector<4x1xf32> to vector<4x1xf32>
    %15 = vector.broadcast %14 : vector<4x1xf32> to vector<4x256xf32>
    %16 = vector.extract_strided_slice %3 {offsets = [0, 2], sizes = [4, 1], strides = [1, 1]} : vector<4x4xf32> to vector<4x1xf32>
    %17 = vector.shape_cast %16 : vector<4x1xf32> to vector<4x1xf32>
    %18 = vector.broadcast %17 : vector<4x1xf32> to vector<4x256xf32>
    %19 = vector.extract_strided_slice %3 {offsets = [0, 3], sizes = [4, 1], strides = [1, 1]} : vector<4x4xf32> to vector<4x1xf32>
    %20 = vector.shape_cast %19 : vector<4x1xf32> to vector<4x1xf32>
    %21 = vector.broadcast %20 : vector<4x1xf32> to vector<4x256xf32>
    %c0_i32 = arith.constant 0 : i32
    %c256_i32 = arith.constant 256 : i32
    %22 = arith.muli %c0_i32, %c256_i32 : i32
    %23 = tpu.assume_multiple %22, 256 : i32
    %c0_7 = arith.constant 0 : index
    %24 = arith.index_cast %23 : i32 to index
    %25 = vector.load %arg1[%c0_7, %24] : memref<2x256xf32, #tpu.memory_space<vmem>>, vector<2x256xf32>
    %26 = vector.extract_strided_slice %25 {offsets = [0, 0], sizes = [1, 256], strides = [1, 1]} : vector<2x256xf32> to vector<1x256xf32>
    %27 = vector.broadcast %26 : vector<1x256xf32> to vector<10x256xf32>
    %28 = arith.mulf %6, %27 : vector<10x256xf32>
    %29 = vector.extract_strided_slice %25 {offsets = [1, 0], sizes = [1, 256], strides = [1, 1]} : vector<2x256xf32> to vector<1x256xf32>
    %30 = vector.broadcast %29 : vector<1x256xf32> to vector<10x256xf32>
    %31 = arith.mulf %9, %30 : vector<10x256xf32>
    %32 = arith.addf %28, %31 : vector<10x256xf32>
    %cst = arith.constant 0.000000e+00 : f32
    %33 = vector.broadcast %cst : f32 to vector<10x256xf32>
    %34 = arith.maximumf %32, %33 : vector<10x256xf32>
    %cst_8 = arith.constant dense<0.000000e+00> : vector<50x256xf32>
    %35 = tpu.matmul %1, %34, %cst_8 {dimension_numbers = #tpu.dot_dimension_numbers<[1], [0], [0], [1], [0, 0, 1, 1], [], []>} : vector<50x10xf32>, vector<10x256xf32>, vector<50x256xf32> -> vector<50x256xf32>
    %cst_9 = arith.constant 0.000000e+00 : f32
    %36 = vector.broadcast %cst_9 : f32 to vector<50x256xf32>
    %37 = arith.maximumf %35, %36 : vector<50x256xf32>
    %cst_10 = arith.constant dense<0.000000e+00> : vector<4x256xf32>
    %38 = tpu.matmul %2, %37, %cst_10 {dimension_numbers = #tpu.dot_dimension_numbers<[1], [0], [0], [1], [0, 0, 1, 1], [], []>} : vector<4x50xf32>, vector<50x256xf32>, vector<4x256xf32> -> vector<4x256xf32>
    %cst_11 = arith.constant 0.000000e+00 : f32
    %39 = vector.broadcast %cst_11 : f32 to vector<4x256xf32>
    %40 = arith.maximumf %38, %39 : vector<4x256xf32>
    %41 = vector.extract_strided_slice %40 {offsets = [0, 0], sizes = [1, 256], strides = [1, 1]} : vector<4x256xf32> to vector<1x256xf32>
    %42 = vector.broadcast %41 : vector<1x256xf32> to vector<4x256xf32>
    %43 = arith.mulf %12, %42 : vector<4x256xf32>
    %44 = vector.extract_strided_slice %40 {offsets = [1, 0], sizes = [1, 256], strides = [1, 1]} : vector<4x256xf32> to vector<1x256xf32>
    %45 = vector.broadcast %44 : vector<1x256xf32> to vector<4x256xf32>
    %46 = arith.mulf %15, %45 : vector<4x256xf32>
    %47 = arith.addf %43, %46 : vector<4x256xf32>
    %48 = vector.extract_strided_slice %40 {offsets = [2, 0], sizes = [1, 256], strides = [1, 1]} : vector<4x256xf32> to vector<1x256xf32>
    %49 = vector.broadcast %48 : vector<1x256xf32> to vector<4x256xf32>
    %50 = arith.mulf %18, %49 : vector<4x256xf32>
    %51 = arith.addf %47, %50 : vector<4x256xf32>
    %52 = vector.extract_strided_slice %40 {offsets = [3, 0], sizes = [1, 256], strides = [1, 1]} : vector<4x256xf32> to vector<1x256xf32>
    %53 = vector.broadcast %52 : vector<1x256xf32> to vector<4x256xf32>
    %54 = arith.mulf %21, %53 : vector<4x256xf32>
    %55 = arith.addf %51, %54 : vector<4x256xf32>
    %cst_12 = arith.constant dense<0xFF800000> : vector<256xf32>
    %56 = vector.multi_reduction <maximumf>, %55, %cst_12 [0] : vector<4x256xf32> to vector<256xf32>
    %57 = vector.shape_cast %56 : vector<256xf32> to vector<1x256xf32>
    %58 = vector.broadcast %57 : vector<1x256xf32> to vector<4x256xf32>
    %59 = arith.subf %55, %58 : vector<4x256xf32>
    %60 = math.exp %59 : vector<4x256xf32>
    %cst_13 = arith.constant dense<0.000000e+00> : vector<256xf32>
    %61 = vector.multi_reduction <add>, %60, %cst_13 [0] : vector<4x256xf32> to vector<256xf32>
    %62 = vector.shape_cast %61 : vector<256xf32> to vector<1x256xf32>
    %63 = tpu.reciprocal %62 {approx = true} : vector<1x256xf32> -> vector<1x256xf32>
    %64 = vector.broadcast %63 : vector<1x256xf32> to vector<4x256xf32>
    %65 = arith.mulf %60, %64 : vector<4x256xf32>
    %c0_14 = arith.constant 0 : index
    %66 = arith.index_cast %23 : i32 to index
    %67 = vector.load %arg6[%c0_14, %66] : memref<4x256xf32, #tpu.memory_space<vmem>>, vector<4x256xf32>
    tpu.vector_store %arg6[%c0_14, %66], %65 {strides = array<i32>} : memref<4x256xf32, #tpu.memory_space<vmem>>, vector<4x256xf32>,
    %c1_i32 = arith.constant 1 : i32
    return
  }
  func.func @transform_0(%arg0: i32) -> (i32, i32) {
    %c0_i32 = arith.constant 0 : i32
    %c0_i32_0 = arith.constant 0 : i32
    return %c0_i32, %arg0 : i32, i32
  }
  func.func @transform_1(%arg0: i32) -> (i32, i32) {
    %c0_i32 = arith.constant 0 : i32
    %c0_i32_0 = arith.constant 0 : i32
    %c0_i32_1 = arith.constant 0 : i32
    return %c0_i32, %c0_i32_0 : i32, i32
  }
  func.func @transform_2(%arg0: i32) -> (i32, i32) {
    %c0_i32 = arith.constant 0 : i32
    %c0_i32_0 = arith.constant 0 : i32
    %c0_i32_1 = arith.constant 0 : i32
    return %c0_i32, %c0_i32_0 : i32, i32
  }
  func.func @transform_3(%arg0: i32) -> (i32, i32) {
    %c0_i32 = arith.constant 0 : i32
    %c0_i32_0 = arith.constant 0 : i32
    %c0_i32_1 = arith.constant 0 : i32
    return %c0_i32, %c0_i32_0 : i32, i32
  }
  func.func @transform_4(%arg0: i32) -> (i32, i32) {
    %c0_i32 = arith.constant 0 : i32
    %c0_i32_0 = arith.constant 0 : i32
    %c0_i32_1 = arith.constant 0 : i32
    return %c0_i32, %c0_i32_0 : i32, i32
  }
  func.func @transform_5(%arg0: i32) -> (i32, i32) {
    %c0_i32 = arith.constant 0 : i32
    %c0_i32_0 = arith.constant 0 : i32
    return %c0_i32, %arg0 : i32, i32
  }
}

</mosaic_0001>

<llo_original>
// kernel: quadra_gpu_net.1
$region0: #{quadra_gpu_net.1}
  #allocation0 [shape = 'u32[]', space=smem, size = 0x4, offset = 0x4, fixed_abs, tag = 'smem constant byte address 0x4 - core index']
  #allocation1 [shape = 'u32[72,128]{1,0:T(1,128)}', space=vmem, size = 0x9000, scoped, tag = 'internal scratch']
  %s0 = inlined_call_operand.vmem [shape: f32[2,256], index: 0, kind: input, shape index: {}]
  %s1 = inlined_call_operand.vmem [shape: f32[10,2], index: 1, kind: input, shape index: {}]
  %s2 = inlined_call_operand.vmem [shape: f32[50,10], index: 2, kind: input, shape index: {}]
  %s3 = inlined_call_operand.vmem [shape: f32[4,50], index: 3, kind: input, shape index: {}]
  %s4 = inlined_call_operand.vmem [shape: f32[4,4], index: 4, kind: input, shape index: {}]
  %s5 = inlined_call_operand.vmem [shape: f32[4,256], index: 5, kind: output, shape index: {}]
  %s6 = sld [smem:[#allocation0]]
  $region30: #{quadra_gpu_net.1} parent=0
    _
  %s8 = ssub.s32 1, %s6
  %s9 = scalar_select 0, %s8, %s6
  // Predicated region
  $region2: #{quadra_gpu_net.1} parent=0 // pred_check
    _
  $region3: #{quadra_gpu_net.1} parent=0 // pred_check_branch
    %11 = sbr.rel (0) target = $region5
  $region4: #{quadra_gpu_net.1} parent=0 // pred_region
    _
  $region5: #{quadra_gpu_net.1} parent=0 // pred_fallthru
    _
  // Predicated region
  $region6: #{quadra_gpu_net.1} parent=0 // pred_check
    _
  $region7: #{quadra_gpu_net.1} parent=0 // pred_check_branch
    %13 = sbr.rel (0) target = $region9
  $region8: #{quadra_gpu_net.1} parent=0 // pred_region
    _
  $region9: #{quadra_gpu_net.1} parent=0 // pred_fallthru
    _
  // Predicated region
  $region10: #{quadra_gpu_net.1} parent=0 // pred_check
    _
  $region11: #{quadra_gpu_net.1} parent=0 // pred_check_branch
    %15 = sbr.rel (0) target = $region13
  $region12: #{quadra_gpu_net.1} parent=0 // pred_region
    _
  $region13: #{quadra_gpu_net.1} parent=0 // pred_fallthru
    _
  // Predicated region
  $region14: #{quadra_gpu_net.1} parent=0 // pred_check
    _
  $region15: #{quadra_gpu_net.1} parent=0 // pred_check_branch
    %17 = sbr.rel (0) target = $region17
  $region16: #{quadra_gpu_net.1} parent=0 // pred_region
    _
  $region17: #{quadra_gpu_net.1} parent=0 // pred_fallthru
    _
  // Predicated region
  $region18: #{quadra_gpu_net.1} parent=0 // pred_check
    _
  $region19: #{quadra_gpu_net.1} parent=0 // pred_check_branch
    %19 = sbr.rel (0) target = $region21
  $region20: #{quadra_gpu_net.1} parent=0 // pred_region
    _
  $region21: #{quadra_gpu_net.1} parent=0 // pred_fallthru
    _
  %v20 = vld [vmem:[%s1] sm:$0xff]
  %v21 = vld [vmem:[%s1 + $0x8] sm:$0x3]
  %v22 = vld [vmem:[%s2] sm:$0xff]
  %v23 = vld [vmem:[%s2 + $0x8] sm:$0xff]
  %v24 = vld [vmem:[%s2 + $0x10] sm:$0xff]
  %v25 = vld [vmem:[%s2 + $0x18] sm:$0xff]
  %v26 = vld [vmem:[%s2 + $0x20] sm:$0xff]
  %v27 = vld [vmem:[%s2 + $0x28] sm:$0xff]
  %v28 = vld [vmem:[%s2 + $0x30] sm:$0x3]
  %v29 = vld [vmem:[%s3] sm:$0xf]
  %v30 = vld [vmem:[%s4] sm:$0xf]
  %32 = vset.pattern.permute.xlu0 0
  %33 = vperm.xlu0 %32, %v20
  %v34 = vpop.permute.xlu0 %33
  %37 = vset.pattern.permute.xlu0 0
  %38 = vperm.xlu0 %37, %v21
  %v39 = vpop.permute.xlu0 %38
  %41 = vset.pattern.permute.xlu0 1
  %42 = vperm.xlu0 %41, %v20
  %v43 = vpop.permute.xlu0 %42
  %45 = vset.pattern.permute.xlu0 1
  %46 = vperm.xlu0 %45, %v21
  %v47 = vpop.permute.xlu0 %46
  %50 = vset.pattern.permute.xlu0 0
  %51 = vperm.xlu0 %50, %v30
  %v52 = vpop.permute.xlu0 %51
  %54 = vset.pattern.permute.xlu0 1
  %55 = vperm.xlu0 %54, %v30
  %v56 = vpop.permute.xlu0 %55
  %58 = vset.pattern.permute.xlu0 2
  %59 = vperm.xlu0 %58, %v30
  %v60 = vpop.permute.xlu0 %59
  %62 = vset.pattern.permute.xlu0 3
  %63 = vperm.xlu0 %62, %v30
  %v64 = vpop.permute.xlu0 %63
  %v66 = vld [vmem:[%s0] sm:$0xf]
  %v68 = vperm.slane %v66, 0
  %v69 = vperm.slane %v66, 2
  %v72 = vperm.slane %v68, 0
  %v73 = vperm.slane %v69, 0
  %v74 = vmul.f32 %v34, %v72
  %v75 = vmul.f32 %v34, %v73
  %v76 = vmul.f32 %v39, %v72
  %v77 = vmul.f32 %v39, %v73
  %v78 = vperm.slane %v66, 1
  %v79 = vperm.slane %v66, 3
  %v82 = vperm.slane %v78, 1
  %v83 = vperm.slane %v79, 1
  %v84 = vmul.f32 %v43, %v82
  %v85 = vmul.f32 %v43, %v83
  %v86 = vmul.f32 %v47, %v82
  %v87 = vmul.f32 %v47, %v83
  %v88 = vadd.f32 %v74, %v84
  %v89 = vadd.f32 %v75, %v85
  %v90 = vadd.f32 %v76, %v86
  %v91 = vadd.f32 %v77, %v87
  %v92 = vmax.f32 %v88, 0.0
  %v93 = vmax.f32 %v89, 0.0
  %v94 = vmax.f32 %v90, 0.0
  %v95 = vmax.f32 %v91, 0.0
  %vm96 = vcmask 80896
  %v98 = vsel %vm96, %v22, 0
  %v101 = vsel %vm96, %v23, 0
  %v104 = vsel %vm96, %v24, 0
  %v107 = vsel %vm96, %v25, 0
  %v110 = vsel %vm96, %v26, 0
  %v113 = vsel %vm96, %v27, 0
  %v116 = vsel %vm96, %v28, 0
  %vm118 = vcmask 1041408
  %v120 = vsel %vm118, %v94, 0
  %v123 = vsel %vm118, %v95, 0
  %125 = vmatpush.msra.mxu0 0.0
  %126 = vmatpush.msra.mxu0 0.0
  %127 = vmatpush.msra.mxu0 0.0
  %128 = vmatpush.msra.mxu0 0.0
  %129 = vmatpush.msra.mxu0 0.0
  %130 = vmatpush.msra.mxu0 0.0
  %131 = vmatpush.msra.mxu0 0.0
  %132 = vmatpush.msra.mxu0 0.0
  %133 = vmatpush.msra.mxu0 0.0
  %134 = vmatpush.msra.mxu0 0.0
  %135 = vmatpush.msra.mxu0 0.0
  %136 = vmatpush.msra.mxu0 0.0
  %137 = vmatpush.msra.mxu0 0.0
  %138 = vmatpush.msra.mxu0 0.0
  %139 = vmatpush.msra.mxu0 %v120
  %140 = vmatpush.msra.mxu0 %v92
  %141 = vmatmul.f32.gmra.mxu0 %v98
  %v142 = vpop.f32.mrf.mxu0
  %v143 = vadd.f32 0.0, %v142
  %144 = vmatmul.f32.gmra.mxu0 %v101
  %v145 = vpop.f32.mrf.mxu0
  %v146 = vadd.f32 0.0, %v145
  %147 = vmatmul.f32.gmra.mxu0 %v104
  %v148 = vpop.f32.mrf.mxu0
  %v149 = vadd.f32 0.0, %v148
  %150 = vmatmul.f32.gmra.mxu0 %v107
  %v151 = vpop.f32.mrf.mxu0
  %v152 = vadd.f32 0.0, %v151
  %153 = vmatmul.f32.gmra.mxu0 %v110
  %v154 = vpop.f32.mrf.mxu0
  %v155 = vadd.f32 0.0, %v154
  %156 = vmatmul.f32.gmra.mxu0 %v113
  %v157 = vpop.f32.mrf.mxu0
  %v158 = vadd.f32 0.0, %v157
  %159 = vmatmul.f32.gmra.mxu0 %v116
  %v160 = vpop.f32.mrf.mxu0
  %v161 = vadd.f32 0.0, %v160
  %162 = vdwg.mxu0
  %163 = vmatpush.msra.mxu0 0.0
  %164 = vmatpush.msra.mxu0 0.0
  %165 = vmatpush.msra.mxu0 0.0
  %166 = vmatpush.msra.mxu0 0.0
  %167 = vmatpush.msra.mxu0 0.0
  %168 = vmatpush.msra.mxu0 0.0
  %169 = vmatpush.msra.mxu0 0.0
  %170 = vmatpush.msra.mxu0 0.0
  %171 = vmatpush.msra.mxu0 0.0
  %172 = vmatpush.msra.mxu0 0.0
  %173 = vmatpush.msra.mxu0 0.0
  %174 = vmatpush.msra.mxu0 0.0
  %175 = vmatpush.msra.mxu0 0.0
  %176 = vmatpush.msra.mxu0 0.0
  %177 = vmatpush.msra.mxu0 %v123
  %178 = vmatpush.msra.mxu0 %v93
  %179 = vmatmul.f32.gmra.mxu0 %v98
  %v180 = vpop.f32.mrf.mxu0
  %v181 = vadd.f32 0.0, %v180
  %182 = vmatmul.f32.gmra.mxu0 %v101
  %v183 = vpop.f32.mrf.mxu0
  %v184 = vadd.f32 0.0, %v183
  %185 = vmatmul.f32.gmra.mxu0 %v104
  %v186 = vpop.f32.mrf.mxu0
  %v187 = vadd.f32 0.0, %v186
  %188 = vmatmul.f32.gmra.mxu0 %v107
  %v189 = vpop.f32.mrf.mxu0
  %v190 = vadd.f32 0.0, %v189
  %191 = vmatmul.f32.gmra.mxu0 %v110
  %v192 = vpop.f32.mrf.mxu0
  %v193 = vadd.f32 0.0, %v192
  %194 = vmatmul.f32.gmra.mxu0 %v113
  %v195 = vpop.f32.mrf.mxu0
  %v196 = vadd.f32 0.0, %v195
  %197 = vmatmul.f32.gmra.mxu0 %v116
  %v198 = vpop.f32.mrf.mxu0
  %v199 = vadd.f32 0.0, %v198
  %200 = vdwg.mxu0
  %v201 = vmax.f32 %v143, 0.0
  %v202 = vmax.f32 %v181, 0.0
  %v203 = vmax.f32 %v146, 0.0
  %v204 = vmax.f32 %v184, 0.0
  %v205 = vmax.f32 %v149, 0.0
  %v206 = vmax.f32 %v187, 0.0
  %v207 = vmax.f32 %v152, 0.0
  %v208 = vmax.f32 %v190, 0.0
  %v209 = vmax.f32 %v155, 0.0
  %v210 = vmax.f32 %v193, 0.0
  %v211 = vmax.f32 %v158, 0.0
  %v212 = vmax.f32 %v196, 0.0
  %v213 = vmax.f32 %v161, 0.0
  %v214 = vmax.f32 %v199, 0.0
  %vm215 = vcmask 408576
  %v217 = vsel %vm215, %v29, 0
  %v220 = vsel %vm118, %v213, 0
  %v223 = vsel %vm118, %v214, 0
  %225 = vmatpush.msra.mxu0 0.0
  %226 = vmatpush.msra.mxu0 0.0
  %227 = vmatpush.msra.mxu0 0.0
  %228 = vmatpush.msra.mxu0 0.0
  %229 = vmatpush.msra.mxu0 0.0
  %230 = vmatpush.msra.mxu0 0.0
  %231 = vmatpush.msra.mxu0 0.0
  %232 = vmatpush.msra.mxu0 0.0
  %233 = vmatpush.msra.mxu0 0.0
  %234 = vmatpush.msra.mxu0 %v220
  %235 = vmatpush.msra.mxu0 %v211
  %236 = vmatpush.msra.mxu0 %v209
  %237 = vmatpush.msra.mxu0 %v207
  %238 = vmatpush.msra.mxu0 %v205
  %239 = vmatpush.msra.mxu0 %v203
  %240 = vmatpush.msra.mxu0 %v201
  %241 = vmatmul.f32.gmra.mxu0 %v217
  %v242 = vpop.f32.mrf.mxu0
  %v243 = vadd.f32 0.0, %v242
  %244 = vdwg.mxu0
  %245 = vmatpush.msra.mxu0 0.0
  %246 = vmatpush.msra.mxu0 0.0
  %247 = vmatpush.msra.mxu0 0.0
  %248 = vmatpush.msra.mxu0 0.0
  %249 = vmatpush.msra.mxu0 0.0
  %250 = vmatpush.msra.mxu0 0.0
  %251 = vmatpush.msra.mxu0 0.0
  %252 = vmatpush.msra.mxu0 0.0
  %253 = vmatpush.msra.mxu0 0.0
  %254 = vmatpush.msra.mxu0 %v223
  %255 = vmatpush.msra.mxu0 %v212
  %256 = vmatpush.msra.mxu0 %v210
  %257 = vmatpush.msra.mxu0 %v208
  %258 = vmatpush.msra.mxu0 %v206
  %259 = vmatpush.msra.mxu0 %v204
  %260 = vmatpush.msra.mxu0 %v202
  %261 = vmatmul.f32.gmra.mxu0 %v217
  %v262 = vpop.f32.mrf.mxu0
  %v263 = vadd.f32 0.0, %v262
  %264 = vdwg.mxu0
  %v265 = vmax.f32 %v243, 0.0
  %v266 = vmax.f32 %v263, 0.0
  %v267 = vperm.slane %v265, 0
  %v268 = vperm.slane %v266, 0
  %v269 = vmul.f32 %v52, %v267
  %v270 = vmul.f32 %v52, %v268
  %v271 = vperm.slane %v265, 1
  %v272 = vperm.slane %v266, 1
  %v273 = vmul.f32 %v56, %v271
  %v274 = vmul.f32 %v56, %v272
  %v275 = vadd.f32 %v269, %v273
  %v276 = vadd.f32 %v270, %v274
  %v277 = vperm.slane %v265, 2
  %v278 = vperm.slane %v266, 2
  %v279 = vmul.f32 %v60, %v277
  %v280 = vmul.f32 %v60, %v278
  %v281 = vadd.f32 %v275, %v279
  %v282 = vadd.f32 %v276, %v280
  %v283 = vperm.slane %v265, 3
  %v284 = vperm.slane %v266, 3
  %v285 = vmul.f32 %v64, %v283
  %v286 = vmul.f32 %v64, %v284
  %v287 = vadd.f32 %v281, %v285
  %v288 = vadd.f32 %v282, %v286
  %vm289 = vcmask 1043456
  %v290 = vsel %vm289, %v287, -inf
  %v291 = vrot.slane %v290, 4
  %v292 = vmax.f32 %v290, %v291
  %v293 = vrot.slane %v292, 2
  %v294 = vmax.f32 %v292, %v293
  %v295 = vrot.slane %v294, 1
  %v296 = vmax.f32 %v294, %v295
  %v297 = vsel %vm289, %v288, -inf
  %v298 = vrot.slane %v297, 4
  %v299 = vmax.f32 %v297, %v298
  %v300 = vrot.slane %v299, 2
  %v301 = vmax.f32 %v299, %v300
  %v302 = vrot.slane %v301, 1
  %v303 = vmax.f32 %v301, %v302
  %v304 = vsub.f32 %v287, %v296
  %v305 = vsub.f32 %v288, %v303
  %v306 = vmul.f32 %v304, 1.442695
  %v307 = vpow.pop %v306
  %v308 = vmul.f32 %v305, 1.442695
  %v309 = vpow.pop %v308
  %v310 = vsel %vm289, %v307, 0.0
  %v311 = vrot.slane %v310, 4
  %v312 = vadd.f32 %v310, %v311
  %v313 = vrot.slane %v312, 2
  %v314 = vadd.f32 %v312, %v313
  %v315 = vrot.slane %v314, 1
  %v316 = vadd.f32 %v314, %v315
  %v317 = vsel %vm289, %v309, 0.0
  %v318 = vrot.slane %v317, 4
  %v319 = vadd.f32 %v317, %v318
  %v320 = vrot.slane %v319, 2
  %v321 = vadd.f32 %v319, %v320
  %v322 = vrot.slane %v321, 1
  %v323 = vadd.f32 %v321, %v322
  %v324 = vrcp.pop %v316
  %v325 = vrcp.pop %v323
  %v326 = vmul.f32 %v307, %v324
  %v327 = vmul.f32 %v309, %v325
  %v330 = vrot.slane %v327, 4
  %v331 = vsel %vm289, %v326, %v330
  %333 = vst [vmem:[%s5] sm:$0xff] %v331
  // Predicated region
  $region22: #{quadra_gpu_net.1} parent=0 // pred_check
    _
  $region23: #{quadra_gpu_net.1} parent=0 // pred_check_branch
    %335 = sbr.rel (0) target = $region25
  $region24: #{quadra_gpu_net.1} parent=0 // pred_region
    _
  $region25: #{quadra_gpu_net.1} parent=0 // pred_fallthru
    _
  // Predicated region
  $region26: #{quadra_gpu_net.1} parent=0 // pred_check
    _
  $region27: #{quadra_gpu_net.1} parent=0 // pred_check_branch
    %337 = sbr.rel (0) target = $region29
  $region28: #{quadra_gpu_net.1} parent=0 // pred_region
    _
  $region29: #{quadra_gpu_net.1} parent=0 // pred_fallthru
    _

</llo_original>
